<compile_context>
chip_gen: v6e
topology: v6e:2x2x1
jax: 0.10.0
libtpu: 0.0.40
codegen_flags: <defaults>
</compile_context>

<pallas_src>
import math
import numpy as np
import jax
import jax.numpy as jnp
from jax.experimental import pallas as pl
from jax.experimental.pallas import tpu as pltpu

# ---------------------------------------------------------------------------
# Config matching Embeddings defaults (forward hard-codes hidden=384, 8x8 grid,
# clamp(., 63, 64) - 63, i.e. 8x8 binary-mask patches).
# ---------------------------------------------------------------------------
PATCH = 8
IMG = 64
IN_CH = 3
HIDDEN = 384
GRID = IMG // PATCH            # 8
NUM_PATCHES = GRID * GRID      # 64
K = IN_CH * PATCH * PATCH      # 192  (flattened conv receptive field)
PP = PATCH * PATCH             # 64   (mask receptive field)
BLOCK_ROWS = 2048              # max patches per grid step (= 32 images)
_STEP_OVERHEAD_ROWS = 256      # ~0.35 us/step pipeline overhead in row-equivalents


def positionalencoding2d(d_model, height, width):
    """NumPy port of the reference torch positionalencoding2d -> (d_model, H, W)."""
    if d_model % 4 != 0:
        raise ValueError("d_model must be divisible by 4, got %d" % d_model)
    pe = np.zeros((d_model, height, width), dtype=np.float32)
    dm = d_model // 2
    div_term = np.exp(np.arange(0.0, dm, 2, dtype=np.float32) * -(math.log(10000.0) / dm))
    pos_w = np.arange(0.0, width, dtype=np.float32)[:, None]
    pos_h = np.arange(0.0, height, dtype=np.float32)[:, None]
    pe[0:dm:2, :, :] = np.repeat(np.sin(pos_w * div_term).T[:, None, :], height, axis=1)
    pe[1:dm:2, :, :] = np.repeat(np.cos(pos_w * div_term).T[:, None, :], height, axis=1)
    pe[dm::2, :, :] = np.repeat(np.sin(pos_h * div_term).T[:, :, None], width, axis=2)
    pe[dm + 1::2, :, :] = np.repeat(np.cos(pos_h * div_term).T[:, :, None], width, axis=2)
    return pe


# ---------------------------------------------------------------------------
# Pallas kernel — one grid step per BM-row block of the flattened patch axis
# (M = B * 64, every block starts on an image boundary).
#   xp_ref  : (BM, K)               bf16 masked-image patches, (c, kh, kw) order
#   w_ref   : (K, HIDDEN)           bf16 reshaped Conv2d weight       (resident)
#   posb_ref: (NUM_PATCHES, HIDDEN) f32 positional encoding + conv bias (resident)
# output:
#   emb_ref : (BM, HIDDEN)          embeddings (f32 by default)
# ---------------------------------------------------------------------------
def _embed_kernel(xp_ref, w_ref, posb_ref, emb_ref):
    # Patch-embedding Conv2d (kernel == stride) as a bf16 MXU matmul, f32 acc.
    acc = jnp.dot(xp_ref[...], w_ref[...], preferred_element_type=jnp.float32)
    bm = acc.shape[0]
    # pos+bias repeats every 64 rows -> broadcast-add the resident 64-row block
    # (free VPU filler under the MXU/DMA; avoids streaming a tiled copy).
    acc = acc.reshape(bm // NUM_PATCHES, NUM_PATCHES, HIDDEN) + posb_ref[...]
    emb_ref[...] = acc.reshape(bm, HIDDEN).astype(emb_ref.dtype)


def _pick_block_rows(M, block_rows, min_steps=2):
    """Largest BM (multiple of 64 so pos stays aligned) minimizing padded rows
    plus per-step overhead; capped so num_steps >= min_steps (v7x dual-TC)."""
    cap = min(block_rows, M)
    if min_steps > 1 and M >= min_steps * NUM_PATCHES:
        cap = min(cap, M // min_steps)
    cap = max(NUM_PATCHES, (cap // NUM_PATCHES) * NUM_PATCHES)
    best_bm, best_cost = NUM_PATCHES, None
    for bm in range(NUM_PATCHES, cap + 1, NUM_PATCHES):
        steps = -(-M // bm)
        cost = steps * bm + _STEP_OVERHEAD_ROWS * steps   # padded rows + overhead
        if best_cost is None or cost < best_cost or (cost == best_cost and bm > best_bm):
            best_bm, best_cost = bm, cost
    return best_bm


def _vmem_limit_bytes(BM, out_itemsize):
    # Double-buffered footprint (conservatively x2 even for resident blocks).
    footprint = (2 * BM * K * 2                      # xp, bf16
                 + 2 * BM * HIDDEN * out_itemsize    # emb out
                 + 2 * K * HIDDEN * 2                # weight, bf16
                 + 2 * NUM_PATCHES * HIDDEN * 4)     # pos+bias, f32
    needed = footprint + (4 << 20)                   # headroom for internal scratch
    try:
        cap = pltpu.get_tpu_info().vmem_capacity_bytes   # 128 MiB v5e/v6e, 64 MiB v7x
    except Exception:
        cap = 64 << 20
    return int(min(max(needed, 24 << 20), cap * 3 // 4))


def embeddings_forward(x, mask, w_mat, conv_b, pos_flat, *,
                       block_rows=BLOCK_ROWS, out_dtype=jnp.float32):
    """x: (B, 3, 64, 64) NCHW f32, mask: (B, 1, 64, 64) f32.
    w_mat: (K, HIDDEN) f32, conv_b: (HIDDEN,) f32, pos_flat: (64, HIDDEN) f32.
    Returns (embeddings (B, 64, 384), update_mask (B, 64), update_mask2 (B, 64))."""
    B = x.shape[0]
    M = B * NUM_PATCHES

    # --- XLA-side glue: mask multiply + patch extraction (single fused pass),
    # cast to bf16 to halve the dominant kernel input stream -----------------
    xm = (x * mask).astype(jnp.bfloat16)
    xp = xm.reshape(B, IN_CH, GRID, PATCH, GRID, PATCH)
    xp = xp.transpose(0, 2, 4, 1, 3, 5).reshape(M, K)              # (M, K) bf16

    # Per-patch mask sums == F.conv2d(mask, ones(1,1,8,8), stride=8): trivial
    # reduction that fuses with the mask read above — kept out of the kernel.
    um2 = mask.reshape(B, GRID, PATCH, GRID, PATCH).sum(axis=(2, 4))
    update_mask2 = um2.reshape(B, NUM_PATCHES).astype(jnp.float32)
    update_mask = jnp.clip(update_mask2, 63.0, 64.0) - 63.0

    # --- row-block sizing: multiple of 64 (image/pos boundary), >= 2 steps ---
    BM = _pick_block_rows(M, block_rows)
    M_pad = -(-M // BM) * BM
    if M_pad != M:
        xp = jnp.pad(xp, ((0, M_pad - M), (0, 0)))

    w_bf = w_mat.astype(jnp.bfloat16)                              # (K, HIDDEN)
    pos_b = (pos_flat + conv_b[None, :]).astype(jnp.float32)       # (64, HIDDEN) resident

    num_steps = M_pad // BM
    emb = pl.pallas_call(
        _embed_kernel,
        out_shape=jax.ShapeDtypeStruct((M_pad, HIDDEN), out_dtype),
        grid_spec=pltpu.PrefetchScalarGridSpec(
            num_scalar_prefetch=0,
            grid=(num_steps,),
            in_specs=[
                pl.BlockSpec((BM, K), lambda i: (i, 0)),               # xp (streams)
                pl.BlockSpec((K, HIDDEN), lambda i: (0, 0)),           # weight (resident)
                pl.BlockSpec((NUM_PATCHES, HIDDEN), lambda i: (0, 0)), # pos+bias (resident)
            ],
            out_specs=pl.BlockSpec((BM, HIDDEN), lambda i: (i, 0)),    # embeddings
        ),
        compiler_params=pltpu.CompilerParams(
            dimension_semantics=("parallel",),
            vmem_limit_bytes=_vmem_limit_bytes(BM, jnp.dtype(out_dtype).itemsize),
        ),
    )(xp, w_bf, pos_b)

    embeddings = emb[:M].reshape(B, NUM_PATCHES, HIDDEN)
    return embeddings, update_mask, update_mask2
    # TODO(synk): nn.Dropout(0.1) is declared in __init__ but never applied in the
    # i == -1 forward path, and the i != -1 branch (plain conv, no mask/pos) is
    # unused here, so neither is implemented.


# ---------------------------------------------------------------------------
# Reference (plain JAX, f32) + test harness
# ---------------------------------------------------------------------------
def _reference(x, mask, w_mat, conv_b, pos_flat):
    B = x.shape[0]
    xm = x * mask
    xp = xm.reshape(B, IN_CH, GRID, PATCH, GRID, PATCH)
    xp = xp.transpose(0, 2, 4, 1, 3, 5).reshape(B * NUM_PATCHES, K)
    emb = (xp @ w_mat + conv_b[None, :] + jnp.tile(pos_flat, (B, 1)))
    emb = emb.reshape(B, NUM_PATCHES, HIDDEN)
    mp = mask.reshape(B, GRID, PATCH, GRID, PATCH).transpose(0, 1, 3, 2, 4)
    um2 = mp.reshape(B, NUM_PATCHES, PP).sum(-1)
    um = jnp.clip(um2, 63.0, 64.0) - 63.0
    return emb, um, um2


if __name__ == "__main__":
    key = jax.random.PRNGKey(0)
    kx, km, kw, kb, kx2, km2 = jax.random.split(key, 6)

    # Deterministic Conv2d(3, 384, 8, stride=8) parameters (torch OIHW layout).
    bound = 1.0 / math.sqrt(K)
    conv_w = jax.random.uniform(kw, (HIDDEN, IN_CH, PATCH, PATCH),
                                jnp.float32, -bound, bound)
    conv_b = jax.random.uniform(kb, (HIDDEN,), jnp.float32, -bound, bound)
    w_mat = conv_w.reshape(HIDDEN, K).T                            # (K, HIDDEN)

    pos = positionalencoding2d(HIDDEN, GRID, GRID)                 # (384, 8, 8)
    pos_flat = jnp.asarray(pos.reshape(HIDDEN, NUM_PATCHES).T)     # (64, 384)

    def run_case(B, kxi, kmi):
        x = jax.random.normal(kxi, (B, IN_CH, IMG, IMG), dtype=jnp.float32)
        mask = (jax.random.uniform(kmi, (B, 1, IMG, IMG)) > 0.3).astype(jnp.float32)
        emb, um, um2 = jax.block_until_ready(
            embeddings_forward(x, mask, w_mat, conv_b, pos_flat))
        ref_emb, ref_um, ref_um2 = _reference(x, mask, w_mat, conv_b, pos_flat)
        # bf16 matmul inputs (f32 accumulate) -> 2e-2 tolerance on embeddings.
        np.testing.assert_allclose(np.asarray(emb), np.asarray(ref_emb),
                                   rtol=2e-2, atol=2e-2)
        np.testing.assert_allclose(np.asarray(um2), np.asarray(ref_um2),
                                   rtol=1e-5, atol=1e-5)
        np.testing.assert_allclose(np.asarray(um), np.asarray(ref_um),
                                   rtol=1e-5, atol=1e-5)
        assert emb.shape == (B, NUM_PATCHES, HIDDEN)
        assert um.shape == (B, NUM_PATCHES) and um2.shape == (B, NUM_PATCHES)

    run_case(2, kx, km)        # small case: BM = 64, 2 grid steps
    run_case(10, kx2, km2)     # non-power-of-two batch: BM = 320, 2 steps, zero pad
    print("KERNEL_OK")
</pallas_src>

<mosaic_0001>
module attributes {stable_mosaic.version = 11 : i64} {
  func.func @_embed_kernel(%arg0: i32, %arg1: memref<64x192xbf16, #tpu.memory_space<vmem>>, %arg2: memref<192x384xbf16, #tpu.memory_space<vmem>>, %arg3: memref<64x384xf32, #tpu.memory_space<vmem>>, %arg4: memref<64x384xf32, #tpu.memory_space<vmem>>) attributes {dimension_semantics = [#tpu.dimension_semantics<parallel>], iteration_bounds = array<i64: 2>, scalar_prefetch = 0 : i64, scratch_operands = 0 : i64, tpu.core_type = #tpu.core_type<tc>, window_params = [{transform_indices = @transform_0, window_bounds = array<i64: 64, 192>}, {pipeline_mode = #tpu.pipeline_mode<synchronous>, transform_indices = @transform_1, window_bounds = array<i64: 192, 384>}, {pipeline_mode = #tpu.pipeline_mode<synchronous>, transform_indices = @transform_2, window_bounds = array<i64: 64, 384>}, {transform_indices = @transform_3, window_bounds = array<i64: 64, 384>}]} {
    %c0 = arith.constant 0 : index
    %c0_0 = arith.constant 0 : index
    %0 = vector.load %arg1[%c0, %c0_0] : memref<64x192xbf16, #tpu.memory_space<vmem>>, vector<64x192xbf16>
    %c0_1 = arith.constant 0 : index
    %c0_2 = arith.constant 0 : index
    %1 = vector.load %arg2[%c0_1, %c0_2] : memref<192x384xbf16, #tpu.memory_space<vmem>>, vector<192x384xbf16>
    %cst = arith.constant dense<0.000000e+00> : vector<64x384xf32>
    %2 = tpu.matmul %0, %1, %cst {dimension_numbers = #tpu.dot_dimension_numbers<[1], [0], [0], [1], [0, 0, 1, 1], [], []>} : vector<64x192xbf16>, vector<192x384xbf16>, vector<64x384xf32> -> vector<64x384xf32>
    %3 = vector.shape_cast %2 : vector<64x384xf32> to vector<1x64x384xf32>
    %c0_3 = arith.constant 0 : index
    %c0_4 = arith.constant 0 : index
    %4 = vector.load %arg3[%c0_3, %c0_4] : memref<64x384xf32, #tpu.memory_space<vmem>>, vector<64x384xf32>
    %5 = vector.shape_cast %4 : vector<64x384xf32> to vector<1x64x384xf32>
    %6 = arith.addf %3, %5 : vector<1x64x384xf32>
    %7 = vector.shape_cast %6 : vector<1x64x384xf32> to vector<64x384xf32>
    %c0_5 = arith.constant 0 : index
    %c0_6 = arith.constant 0 : index
    %8 = vector.load %arg4[%c0_5, %c0_6] : memref<64x384xf32, #tpu.memory_space<vmem>>, vector<64x384xf32>
    tpu.vector_store %arg4[%c0_5, %c0_6], %7 {strides = array<i32>} : memref<64x384xf32, #tpu.memory_space<vmem>>, vector<64x384xf32>,
    return
  }
  func.func @transform_0(%arg0: i32) -> (i32, i32) {
    %c0_i32 = arith.constant 0 : i32
    %c0_i32_0 = arith.constant 0 : i32
    return %arg0, %c0_i32 : i32, i32
  }
  func.func @transform_1(%arg0: i32) -> (i32, i32) {
    %c0_i32 = arith.constant 0 : i32
    %c0_i32_0 = arith.constant 0 : i32
    %c0_i32_1 = arith.constant 0 : i32
    return %c0_i32, %c0_i32_0 : i32, i32
  }
  func.func @transform_2(%arg0: i32) -> (i32, i32) {
    %c0_i32 = arith.constant 0 : i32
    %c0_i32_0 = arith.constant 0 : i32
    %c0_i32_1 = arith.constant 0 : i32
    return %c0_i32, %c0_i32_0 : i32, i32
  }
  func.func @transform_3(%arg0: i32) -> (i32, i32) {
    %c0_i32 = arith.constant 0 : i32
    %c0_i32_0 = arith.constant 0 : i32
    return %arg0, %c0_i32 : i32, i32
  }
}

</mosaic_0001>

<llo_original>
// kernel: tpu_custom_call.1
$region0: #{tpu_custom_call.1}
  #allocation0 [shape = 'u32[]', space=smem, size = 0x4, offset = 0x4, fixed_abs, tag = 'smem constant byte address 0x4 - core index']
  #allocation1 [shape = 'u32[144,128]{1,0:T(1,128)}', space=vmem, size = 0x12000, scoped, tag = 'internal scratch']
  %s0 = inlined_call_operand.vmem [shape: bf16[128,192], index: 0, kind: input, shape index: {}]
  %s1 = inlined_call_operand.hbm [shape: bf16[192,384], index: 1, kind: input, shape index: {}]
  %s2 = inlined_call_operand.vmem [shape: f32[64,384], index: 2, kind: input, shape index: {}]
  %s3 = inlined_call_operand.hbm [shape: f32[128,384], index: 3, kind: output, shape index: {}]
  %s4 = sld [smem:[#allocation0]]
  $region49: #{tpu_custom_call.1} parent=0
    _
  %s6 = ssub.s32 1, %s4
  %s7 = scalar_select 0, %s6, %s4
  $region1: #{tpu_custom_call.1} parent=0
    #allocation2 [shape = 'u8[147456]{0}', space=vmem, size = 0x24000, scoped, tag = 'input window, operand 1, single buffered']
    #allocation3 [shape = 's32[2]{0}', space=sflag, size = 0x8, scoped, tag = 'scoped memory for tpu_custom_call.1']
    #allocation4 [shape = 's32[2]{0}', space=sflag, size = 0x8, scoped, tag = 'scoped memory for tpu_custom_call.1']
    #allocation5 [shape = 'u8[196608]{0}', space=vmem, size = 0x30000, scoped, tag = 'output window, operand 0']
    %8 = vsyncpa [#allocation3], 0
    %9 = vsyncpa [#allocation4], 0
    %s10 = scalar_lea.sflag [#allocation4], 1
    %11 = vsyncpa %s10, 0
    loop: start=0, step=1, limit=4
    $region2: #{tpu_custom_call.1} parent=1 // loop_pre_header
      _
    $region3: #{tpu_custom_call.1} parent=1 // loop_header
      %s13 = sphi 0, %s17
      %p14 = scmp.ge.s32.totalorder %s13, 4
      %s23 = sphi 0, %s25
      %s26 = sphi 0, %s23
      %s27 = sphi 0, %s26
      %s43 = sphi 0, %s27
      %s47 = sphi 0, %s47
      %s49 = sphi 0, %s47
      %s50 = sphi 0, %s49
      %s64 = sphi 0, %s50
      %s68 = sphi 0, %s68
      %s70 = sphi 0, %s68
      %s71 = sphi 0, %s70
      %s85 = sphi 0, %s71
      %s91 = sphi 0, %s93
      %s94 = sphi 0, %s91
      %s95 = sphi 0, %s94
      %s111 = sphi 0, %s95
    $region4: #{tpu_custom_call.1} parent=1 // loop_header_branch
      %16 = sbr.rel (%p14) target = $region8
    $region5: #{tpu_custom_call.1} parent=1 // loop_body
      %s18 = ssub.s32 %s13, 1
      %s19 = ssub.s32 %s13, 2
      %s20 = sadd.s32 %s13, 1
      %s21 = ssub.s32 %s13, %s20
      %p22 = scmp.eq.s32.totalorder %s21, 0
      %s24 = sadd.s32 %s23, 1
      %s25 = scalar_select %p22, %s23, %s24
      %p28 = pneg %p22
      %p29 = scmp.eq.s32.totalorder %s13, 1
      %p30 = por %p28, %p29
      %p31 = scmp.ne.s32.totalorder %s23, %s26
      %p32 = scmp.eq.s32.totalorder %s13, 0
      %p33 = por %p31, %p32
      %p34 = scmp.ne.s32.totalorder %s23, %s26
      %p35 = scmp.eq.s32.totalorder %s18, 1
      %p36 = por %p34, %p35
      %p37 = scmp.ne.s32.totalorder %s26, %s27
      %p38 = scmp.eq.s32.totalorder %s18, 0
      %p39 = por %p37, %p38
      %p40 = scmp.ne.s32.totalorder %s26, %s27
      %p41 = scmp.eq.s32.totalorder %s19, 1
      %p42 = por %p40, %p41
      %p44 = scmp.ne.s32.totalorder %s27, %s43
      %p45 = scmp.eq.s32.totalorder %s19, 0
      %p46 = por %p44, %p45
      %s48 = sadd.s32 %s47, 1
      %p51 = scmp.eq.s32.totalorder %s13, 1
      %p52 = scmp.ne.s32.totalorder %s47, %s49
      %p53 = scmp.eq.s32.totalorder %s13, 0
      %p54 = por %p52, %p53
      %p55 = scmp.ne.s32.totalorder %s47, %s49
      %p56 = scmp.eq.s32.totalorder %s18, 1
      %p57 = por %p55, %p56
      %p58 = scmp.ne.s32.totalorder %s49, %s50
      %p59 = scmp.eq.s32.totalorder %s18, 0
      %p60 = por %p58, %p59
      %p61 = scmp.ne.s32.totalorder %s49, %s50
      %p62 = scmp.eq.s32.totalorder %s19, 1
      %p63 = por %p61, %p62
      %p65 = scmp.ne.s32.totalorder %s50, %s64
      %p66 = scmp.eq.s32.totalorder %s19, 0
      %p67 = por %p65, %p66
      %s69 = sadd.s32 %s68, 1
      %p72 = scmp.eq.s32.totalorder %s13, 1
      %p73 = scmp.ne.s32.totalorder %s68, %s70
      %p74 = scmp.eq.s32.totalorder %s13, 0
      %p75 = por %p73, %p74
      %p76 = scmp.ne.s32.totalorder %s68, %s70
      %p77 = scmp.eq.s32.totalorder %s18, 1
      %p78 = por %p76, %p77
      %p79 = scmp.ne.s32.totalorder %s70, %s71
      %p80 = scmp.eq.s32.totalorder %s18, 0
      %p81 = por %p79, %p80
      %p82 = scmp.ne.s32.totalorder %s70, %s71
      %p83 = scmp.eq.s32.totalorder %s19, 1
      %p84 = por %p82, %p83
      %p86 = scmp.ne.s32.totalorder %s71, %s85
      %p87 = scmp.eq.s32.totalorder %s19, 0
      %p88 = por %p86, %p87
      %s89 = ssub.s32 %s13, %s20
      %p90 = scmp.eq.s32.totalorder %s89, 0
      %s92 = sadd.s32 %s91, 1
      %s93 = scalar_select %p90, %s91, %s92
      %p96 = pneg %p90
      %p97 = scmp.eq.s32.totalorder %s13, 1
      %p98 = por %p96, %p97
      %p99 = scmp.ne.s32.totalorder %s91, %s94
      %p100 = scmp.eq.s32.totalorder %s13, 0
      %p101 = por %p99, %p100
      %p102 = scmp.ne.s32.totalorder %s91, %s94
      %p103 = scmp.eq.s32.totalorder %s18, 1
      %p104 = por %p102, %p103
      %p105 = scmp.ne.s32.totalorder %s94, %s95
      %p106 = scmp.eq.s32.totalorder %s18, 0
      %p107 = por %p105, %p106
      %p108 = scmp.ne.s32.totalorder %s94, %s95
      %p109 = scmp.eq.s32.totalorder %s19, 1
      %p110 = por %p108, %p109
      %p112 = scmp.ne.s32.totalorder %s95, %s111
      %p113 = scmp.eq.s32.totalorder %s19, 0
      %p114 = por %p112, %p113
      %p115 = scmp.le.s32.totalorder 1, %s13
      %p116 = scmp.lt.s32.totalorder %s13, 3
      %p117 = pnand %p115, %p116
      %p118 = pneg %p117
      // Predicated region
      $region9: #{tpu_custom_call.1} parent=5 // pred_check
        _
      $region10: #{tpu_custom_call.1} parent=5 // pred_check_branch
        %120 = sbr.rel (%p117) target = $region12
      $region11: #{tpu_custom_call.1} parent=5 // pred_region
        %s121 = ssub.s32 %s13, 1
        // Predicated region
        $region13: #{tpu_custom_call.1} parent=11 // pred_check
          %p122 = pneg %p60
        $region14: #{tpu_custom_call.1} parent=11 // pred_check_branch
          %124 = sbr.rel (%p122) target = $region16
        $region15: #{tpu_custom_call.1} parent=11 // pred_region
          %s126 = ssub.s32 4608, 4608
          %127 = vsyncadd [#allocation3], %s126
          %s128 = sshll.u32 [#allocation2], 4
          %s129 = int_to_ptr.vmem [resolvable:$true] %s128
          %134 = dma.hbm_to_vmem [thread:$0]  %s1, 4608, %s129, [#allocation3], 192, 192, 12
        $region16: #{tpu_custom_call.1} parent=11 // pred_fallthru
          _
        // Predicated region
        $region17: #{tpu_custom_call.1} parent=11 // pred_check
          %p135 = pneg %p81
        $region18: #{tpu_custom_call.1} parent=11 // pred_check_branch
          %137 = sbr.rel (%p135) target = $region20
        $region19: #{tpu_custom_call.1} parent=11 // pred_region
          _
        $region20: #{tpu_custom_call.1} parent=11 // pred_fallthru
          _
      $region12: #{tpu_custom_call.1} parent=5 // pred_fallthru
        _
      %p138 = scmp.lt.s32.totalorder %s13, 2
      // Predicated region
      $region21: #{tpu_custom_call.1} parent=5 // pred_check
        %p139 = pneg %p138
      $region22: #{tpu_custom_call.1} parent=5 // pred_check_branch
        %141 = sbr.rel (%p139) target = $region24
      $region23: #{tpu_custom_call.1} parent=5 // pred_region
        // Predicated region
        $region25: #{tpu_custom_call.1} parent=23 // pred_check
          %p142 = pneg %p33
        $region26: #{tpu_custom_call.1} parent=23 // pred_check_branch
          %144 = sbr.rel (%p142) target = $region28
        $region27: #{tpu_custom_call.1} parent=23 // pred_region
          %s145 = smul.u32 8, %s13
          %p146 = scmp.lt.s32.totalorder %s145, 15
          %s147 = scalar_select %p146, %s145, 15
          %s148 = smul.addr %s147, 2
          %s149 = smul.addr %s148, 4
          %s150 = scalar_lea.vmem %s0, %s149
          %s151 = smul.u32 8, %s13
        $region28: #{tpu_custom_call.1} parent=23 // pred_fallthru
          _
      $region24: #{tpu_custom_call.1} parent=5 // pred_fallthru
        _
      %p152 = scmp.le.s32.totalorder 1, %s13
      %p153 = scmp.lt.s32.totalorder %s13, 3
      %p154 = pnand %p152, %p153
      %p155 = pneg %p154
      // Predicated region
      $region29: #{tpu_custom_call.1} parent=5 // pred_check
        _
      $region30: #{tpu_custom_call.1} parent=5 // pred_check_branch
        %157 = sbr.rel (%p154) target = $region32
      $region31: #{tpu_custom_call.1} parent=5 // pred_region
        %s158 = ssub.s32 %s13, 1
        // Predicated region
        $region33: #{tpu_custom_call.1} parent=31 // pred_check
          %p159 = pneg %p60
        $region34: #{tpu_custom_call.1} parent=31 // pred_check_branch
          %161 = sbr.rel (%p159) target = $region36
        $region35: #{tpu_custom_call.1} parent=31 // pred_region
          %162 = dma.done [#allocation3], 4608
        $region36: #{tpu_custom_call.1} parent=31 // pred_fallthru
          _
        %s163 = smul.u32 8, %s18
        %p164 = scmp.lt.s32.totalorder %s163, 15
        %s165 = scalar_select %p164, %s163, 15
        %s166 = smul.addr %s165, 2
        %s167 = smul.addr %s166, 4
        %s168 = scalar_lea.vmem %s0, %s167
        %p169 = pneg %p39
        %p170 = pneg %p36
        %p171 = pneg %p60
        %p172 = pneg %p57
        %p173 = pneg %p81
        %p174 = pneg %p78
        %p175 = pneg %p107
        %p176 = pneg %p104
        %s177 = sand.u32 %s94, 1
        %s178 = scalar_lea.sflag [#allocation4], %s177
        %s179 = sand.u32 %s94, 1
        %s180 = smul.addr %s179, 192
        %s181 = scalar_lea.vmem [#allocation5], %s180
        %s182 = smul.u32 8, %s18
        %p183 = scmp.lt.s32.totalorder %s182, 15
        %s184 = scalar_select %p183, %s182, 15
        %s185 = smul.addr %s184, 2
        %s186 = smul.addr %s185, 4
        %s187 = scalar_lea.vmem %s0, %s186
        %s188 = smul.u32 8, %s18
        %s189 = smul.u32 8, %s18
        %v191 = vld [vmem:[%s187] sm:$0xff]
        %v192 = vld [vmem:[%s187 + $0x8] sm:$0xff]
        %v193 = vld [vmem:[%s187 + $0x10] sm:$0xff]
        %v194 = vld [vmem:[%s187 + $0x18] sm:$0xff]
        %v195 = vld [vmem:[%s187 + $0x20] sm:$0xff]
        %v196 = vld [vmem:[%s187 + $0x28] sm:$0xff]
        %v197 = vld [vmem:[%s187 + $0x30] sm:$0xff]
        %v198 = vld [vmem:[%s187 + $0x38] sm:$0xff]
        %v199 = vld [vmem:[#allocation2] sm:$0xff]
        %v200 = vld [vmem:[#allocation2 + $0x8] sm:$0xf]
        %v201 = vld [vmem:[#allocation2 + $0xc] sm:$0xff]
        %v202 = vld [vmem:[#allocation2 + $0x14] sm:$0xf]
        %v203 = vld [vmem:[#allocation2 + $0x18] sm:$0xff]
        %v204 = vld [vmem:[#allocation2 + $0x20] sm:$0xf]
        %v205 = vld [vmem:[#allocation2 + $0x24] sm:$0xff]
        %v206 = vld [vmem:[#allocation2 + $0x2c] sm:$0xf]
        %v207 = vld [vmem:[#allocation2 + $0x30] sm:$0xff]
        %v208 = vld [vmem:[#allocation2 + $0x38] sm:$0xf]
        %v209 = vld [vmem:[#allocation2 + $0x3c] sm:$0xff]
        %v210 = vld [vmem:[#allocation2 + $0x44] sm:$0xf]
        %v211 = vld [vmem:[#allocation2 + $0x48] sm:$0xff]
        %v212 = vld [vmem:[#allocation2 + $0x50] sm:$0xf]
        %v213 = vld [vmem:[#allocation2 + $0x54] sm:$0xff]
        %v214 = vld [vmem:[#allocation2 + $0x5c] sm:$0xf]
        %v215 = vld [vmem:[#allocation2 + $0x60] sm:$0xff]
        %v216 = vld [vmem:[#allocation2 + $0x68] sm:$0xf]
        %v217 = vld [vmem:[#allocation2 + $0x6c] sm:$0xff]
        %v218 = vld [vmem:[#allocation2 + $0x74] sm:$0xf]
        %v219 = vld [vmem:[#allocation2 + $0x78] sm:$0xff]
        %v220 = vld [vmem:[#allocation2 + $0x80] sm:$0xf]
        %v221 = vld [vmem:[#allocation2 + $0x84] sm:$0xff]
        %v222 = vld [vmem:[#allocation2 + $0x8c] sm:$0xf]
        %v223 = vld [vmem:[#allocation2 + $0x90] sm:$0xff]
        %v224 = vld [vmem:[#allocation2 + $0x98] sm:$0xf]
        %v225 = vld [vmem:[#allocation2 + $0x9c] sm:$0xff]
        %v226 = vld [vmem:[#allocation2 + $0xa4] sm:$0xf]
        %v227 = vld [vmem:[#allocation2 + $0xa8] sm:$0xff]
        %v228 = vld [vmem:[#allocation2 + $0xb0] sm:$0xf]
        %v229 = vld [vmem:[#allocation2 + $0xb4] sm:$0xff]
        %v230 = vld [vmem:[#allocation2 + $0xbc] sm:$0xf]
        %v231 = vld [vmem:[#allocation2 + $0xc0] sm:$0xff]
        %v232 = vld [vmem:[#allocation2 + $0xc8] sm:$0xf]
        %v233 = vld [vmem:[#allocation2 + $0xcc] sm:$0xff]
        %v234 = vld [vmem:[#allocation2 + $0xd4] sm:$0xf]
        %v235 = vld [vmem:[#allocation2 + $0xd8] sm:$0xff]
        %v236 = vld [vmem:[#allocation2 + $0xe0] sm:$0xf]
        %v237 = vld [vmem:[#allocation2 + $0xe4] sm:$0xff]
        %v238 = vld [vmem:[#allocation2 + $0xec] sm:$0xf]
        %v239 = vld [vmem:[#allocation2 + $0xf0] sm:$0xff]
        %v240 = vld [vmem:[#allocation2 + $0xf8] sm:$0xf]
        %v241 = vld [vmem:[#allocation2 + $0xfc] sm:$0xff]
        %v242 = vld [vmem:[#allocation2 + $0x104] sm:$0xf]
        %v243 = vld [vmem:[#allocation2 + $0x108] sm:$0xff]
        %v244 = vld [vmem:[#allocation2 + $0x110] sm:$0xf]
        %v245 = vld [vmem:[#allocation2 + $0x114] sm:$0xff]
        %v246 = vld [vmem:[#allocation2 + $0x11c] sm:$0xf]
        %v255 = vunpack.c.l.b16 %v191
        %v256 = vunpack.c.h.b16 %v191
        %v257 = vunpack.c.l.b16 %v192
        %v258 = vunpack.c.h.b16 %v192
        %v259 = vunpack.c.l.b16 %v193
        %v260 = vunpack.c.h.b16 %v193
        %v261 = vunpack.c.l.b16 %v194
        %v262 = vunpack.c.h.b16 %v194
        %v263 = vunpack.c.l.b16 %v195
        %v264 = vunpack.c.h.b16 %v195
        %v265 = vunpack.c.l.b16 %v196
        %v266 = vunpack.c.h.b16 %v196
        %v267 = vunpack.c.l.b16 %v197
        %v268 = vunpack.c.h.b16 %v197
        %v269 = vunpack.c.l.b16 %v198
        %v270 = vunpack.c.h.b16 %v198
        %v271 = vpack.c.b16 %v257, %v255
        %v272 = vpack.c.b16 %v258, %v256
        %v273 = vpack.c.b16 %v261, %v259
        %v274 = vpack.c.b16 %v262, %v260
        %v275 = vpack.c.b16 %v265, %v263
        %v276 = vpack.c.b16 %v266, %v264
        %v277 = vpack.c.b16 %v269, %v267
        %v278 = vpack.c.b16 %v270, %v268
        %v331 = vunpack.c.l.b16 %v199
        %v332 = vunpack.c.h.b16 %v199
        %v333 = vunpack.c.l.b16 %v200
        %v334 = vunpack.c.l.b16 %v201
        %v335 = vunpack.c.h.b16 %v201
        %v336 = vunpack.c.l.b16 %v202
        %v337 = vunpack.c.l.b16 %v203
        %v338 = vunpack.c.h.b16 %v203
        %v339 = vunpack.c.l.b16 %v204
        %v340 = vunpack.c.l.b16 %v205
        %v341 = vunpack.c.h.b16 %v205
        %v342 = vunpack.c.l.b16 %v206
        %v343 = vunpack.c.l.b16 %v207
        %v344 = vunpack.c.h.b16 %v207
        %v345 = vunpack.c.l.b16 %v208
        %v346 = vunpack.c.l.b16 %v209
        %v347 = vunpack.c.h.b16 %v209
        %v348 = vunpack.c.l.b16 %v210
        %v349 = vunpack.c.l.b16 %v211
        %v350 = vunpack.c.h.b16 %v211
        %v351 = vunpack.c.l.b16 %v212
        %v352 = vunpack.c.l.b16 %v213
        %v353 = vunpack.c.h.b16 %v213
        %v354 = vunpack.c.l.b16 %v214
        %v355 = vunpack.c.l.b16 %v215
        %v356 = vunpack.c.h.b16 %v215
        %v357 = vunpack.c.l.b16 %v216
        %v358 = vunpack.c.l.b16 %v217
        %v359 = vunpack.c.h.b16 %v217
        %v360 = vunpack.c.l.b16 %v218
        %v361 = vunpack.c.l.b16 %v219
        %v362 = vunpack.c.h.b16 %v219
        %v363 = vunpack.c.l.b16 %v220
        %v364 = vunpack.c.l.b16 %v221
        %v365 = vunpack.c.h.b16 %v221
        %v366 = vunpack.c.l.b16 %v222
        %v367 = vunpack.c.l.b16 %v223
        %v368 = vunpack.c.h.b16 %v223
        %v369 = vunpack.c.l.b16 %v224
        %v370 = vunpack.c.l.b16 %v225
        %v371 = vunpack.c.h.b16 %v225
        %v372 = vunpack.c.l.b16 %v226
        %v373 = vunpack.c.l.b16 %v227
        %v374 = vunpack.c.h.b16 %v227
        %v375 = vunpack.c.l.b16 %v228
        %v376 = vunpack.c.l.b16 %v229
        %v377 = vunpack.c.h.b16 %v229
        %v378 = vunpack.c.l.b16 %v230
        %v379 = vunpack.c.l.b16 %v231
        %v380 = vunpack.c.h.b16 %v231
        %v381 = vunpack.c.l.b16 %v232
        %v382 = vunpack.c.l.b16 %v233
        %v383 = vunpack.c.h.b16 %v233
        %v384 = vunpack.c.l.b16 %v234
        %v385 = vunpack.c.l.b16 %v235
        %v386 = vunpack.c.h.b16 %v235
        %v387 = vunpack.c.l.b16 %v236
        %v388 = vunpack.c.l.b16 %v237
        %v389 = vunpack.c.h.b16 %v237
        %v390 = vunpack.c.l.b16 %v238
        %v391 = vunpack.c.l.b16 %v239
        %v392 = vunpack.c.h.b16 %v239
        %v393 = vunpack.c.l.b16 %v240
        %v394 = vunpack.c.l.b16 %v241
        %v395 = vunpack.c.h.b16 %v241
        %v396 = vunpack.c.l.b16 %v242
        %v397 = vunpack.c.l.b16 %v243
        %v398 = vunpack.c.h.b16 %v243
        %v399 = vunpack.c.l.b16 %v244
        %v400 = vunpack.c.l.b16 %v245
        %v401 = vunpack.c.h.b16 %v245
        %v402 = vunpack.c.l.b16 %v246
        %v403 = vpack.c.b16 %v334, %v331
        %v404 = vpack.c.b16 %v335, %v332
        %v405 = vpack.c.b16 %v336, %v333
        %v406 = vpack.c.b16 %v340, %v337
        %v407 = vpack.c.b16 %v341, %v338
        %v408 = vpack.c.b16 %v342, %v339
        %v409 = vpack.c.b16 %v346, %v343
        %v410 = vpack.c.b16 %v347, %v344
        %v411 = vpack.c.b16 %v348, %v345
        %v412 = vpack.c.b16 %v352, %v349
        %v413 = vpack.c.b16 %v353, %v350
        %v414 = vpack.c.b16 %v354, %v351
        %v415 = vpack.c.b16 %v358, %v355
        %v416 = vpack.c.b16 %v359, %v356
        %v417 = vpack.c.b16 %v360, %v357
        %v418 = vpack.c.b16 %v364, %v361
        %v419 = vpack.c.b16 %v365, %v362
        %v420 = vpack.c.b16 %v366, %v363
        %v421 = vpack.c.b16 %v370, %v367
        %v422 = vpack.c.b16 %v371, %v368
        %v423 = vpack.c.b16 %v372, %v369
        %v424 = vpack.c.b16 %v376, %v373
        %v425 = vpack.c.b16 %v377, %v374
        %v426 = vpack.c.b16 %v378, %v375
        %v427 = vpack.c.b16 %v382, %v379
        %v428 = vpack.c.b16 %v383, %v380
        %v429 = vpack.c.b16 %v384, %v381
        %v430 = vpack.c.b16 %v388, %v385
        %v431 = vpack.c.b16 %v389, %v386
        %v432 = vpack.c.b16 %v390, %v387
        %v433 = vpack.c.b16 %v394, %v391
        %v434 = vpack.c.b16 %v395, %v392
        %v435 = vpack.c.b16 %v396, %v393
        %v436 = vpack.c.b16 %v400, %v397
        %v437 = vpack.c.b16 %v401, %v398
        %v438 = vpack.c.b16 %v402, %v399
        %vm475 = vcmask 523264
        %v477 = vsel %vm475, %v272, 0
        %v480 = vsel %vm475, %v274, 0
        %v483 = vsel %vm475, %v276, 0
        %v486 = vsel %vm475, %v278, 0
        %488 = vmatprep.subr.bf16.mxu0 %v425
        %489 = vmatpush1.bf16.msra.mxu0 %v424
        %490 = vmatprep.subr.bf16.mxu0 %v422
        %491 = vmatpush1.bf16.msra.mxu0 %v421
        %492 = vmatprep.subr.bf16.mxu0 %v419
        %493 = vmatpush1.bf16.msra.mxu0 %v418
        %494 = vmatprep.subr.bf16.mxu0 %v416
        %495 = vmatpush1.bf16.msra.mxu0 %v415
        %496 = vmatprep.subr.bf16.mxu0 %v413
        %497 = vmatpush1.bf16.msra.mxu0 %v412
        %498 = vmatprep.subr.bf16.mxu0 %v410
        %499 = vmatpush1.bf16.msra.mxu0 %v409
        %500 = vmatprep.subr.bf16.mxu0 %v407
        %501 = vmatpush1.bf16.msra.mxu0 %v406
        %502 = vmatprep.subr.bf16.mxu0 %v404
        %503 = vmatpush1.bf16.msra.mxu0 %v403
        %504 = vmatprep.subr.bf16.mxu0 0
        %505 = vmatpush2.bf16.msra.mxu0 0
        %506 = vmatprep.subr.bf16.mxu0 0
        %507 = vmatpush2.bf16.msra.mxu0 0
        %508 = vmatprep.subr.bf16.mxu0 0
        %509 = vmatpush2.bf16.msra.mxu0 0
        %510 = vmatprep.subr.bf16.mxu0 0
        %511 = vmatpush2.bf16.msra.mxu0 0
        %512 = vmatprep.subr.bf16.mxu0 %v437
        %513 = vmatpush2.bf16.msra.mxu0 %v436
        %514 = vmatprep.subr.bf16.mxu0 %v434
        %515 = vmatpush2.bf16.msra.mxu0 %v433
        %516 = vmatprep.subr.bf16.mxu0 %v431
        %517 = vmatpush2.bf16.msra.mxu0 %v430
        %518 = vmatprep.subr.bf16.mxu0 %v428
        %519 = vmatpush2.bf16.msra.mxu0 %v427
        %520 = vmatprep.mubr.bf16.mxu0 %v477
        %521 = vmatmul.mubr.bf16.gmra.mxu0 %v271
        %v522 = vpop.f32.mrf.mxu0
        %v523 = vadd.f32 0.0, %v522
        %v524 = vpop.f32.mrf.mxu0
        %v525 = vadd.f32 0.0, %v524
        %v526 = vpop.f32.mrf.mxu0
        %v527 = vadd.f32 0.0, %v526
        %v528 = vpop.f32.mrf.mxu0
        %v529 = vadd.f32 0.0, %v528
        %530 = vmatprep.mubr.bf16.mxu0 %v480
        %531 = vmatmul.mubr.bf16.gmra.mxu0 %v273
        %v532 = vpop.f32.mrf.mxu0
        %v533 = vadd.f32 0.0, %v532
        %v534 = vpop.f32.mrf.mxu0
        %v535 = vadd.f32 0.0, %v534
        %v536 = vpop.f32.mrf.mxu0
        %v537 = vadd.f32 0.0, %v536
        %v538 = vpop.f32.mrf.mxu0
        %v539 = vadd.f32 0.0, %v538
        %540 = vmatprep.mubr.bf16.mxu0 %v483
        %541 = vmatmul.mubr.bf16.gmra.mxu0 %v275
        %v542 = vpop.f32.mrf.mxu0
        %v543 = vadd.f32 0.0, %v542
        %v544 = vpop.f32.mrf.mxu0
        %v545 = vadd.f32 0.0, %v544
        %v546 = vpop.f32.mrf.mxu0
        %v547 = vadd.f32 0.0, %v546
        %v548 = vpop.f32.mrf.mxu0
        %v549 = vadd.f32 0.0, %v548
        %550 = vmatprep.mubr.bf16.mxu0 %v486
        %551 = vmatmul.mubr.bf16.gmra.mxu0 %v277
        %v552 = vpop.f32.mrf.mxu0
        %v553 = vadd.f32 0.0, %v552
        %v554 = vpop.f32.mrf.mxu0
        %v555 = vadd.f32 0.0, %v554
        %v556 = vpop.f32.mrf.mxu0
        %v557 = vadd.f32 0.0, %v556
        %v558 = vpop.f32.mrf.mxu0
        %v559 = vadd.f32 0.0, %v558
        %560 = vdwg.mxu0
        %561 = vmatprep.subr.bf16.mxu0 0
        %562 = vmatpush1.bf16.msra.mxu0 %v426
        %563 = vmatprep.subr.bf16.mxu0 0
        %564 = vmatpush1.bf16.msra.mxu0 %v423
        %565 = vmatprep.subr.bf16.mxu0 0
        %566 = vmatpush1.bf16.msra.mxu0 %v420
        %567 = vmatprep.subr.bf16.mxu0 0
        %568 = vmatpush1.bf16.msra.mxu0 %v417
        %569 = vmatprep.subr.bf16.mxu0 0
        %570 = vmatpush1.bf16.msra.mxu0 %v414
        %571 = vmatprep.subr.bf16.mxu0 0
        %572 = vmatpush1.bf16.msra.mxu0 %v411
        %573 = vmatprep.subr.bf16.mxu0 0
        %574 = vmatpush1.bf16.msra.mxu0 %v408
        %575 = vmatprep.subr.bf16.mxu0 0
        %576 = vmatpush1.bf16.msra.mxu0 %v405
        %577 = vmatprep.subr.bf16.mxu0 0
        %578 = vmatpush2.bf16.msra.mxu0 0
        %579 = vmatprep.subr.bf16.mxu0 0
        %580 = vmatpush2.bf16.msra.mxu0 0
        %581 = vmatprep.subr.bf16.mxu0 0
        %582 = vmatpush2.bf16.msra.mxu0 0
        %583 = vmatprep.subr.bf16.mxu0 0
        %584 = vmatpush2.bf16.msra.mxu0 0
        %585 = vmatprep.subr.bf16.mxu0 0
        %586 = vmatpush2.bf16.msra.mxu0 %v438
        %587 = vmatprep.subr.bf16.mxu0 0
        %588 = vmatpush2.bf16.msra.mxu0 %v435
        %589 = vmatprep.subr.bf16.mxu0 0
        %590 = vmatpush2.bf16.msra.mxu0 %v432
        %591 = vmatprep.subr.bf16.mxu0 0
        %592 = vmatpush2.bf16.msra.mxu0 %v429
        %593 = vmatprep.mubr.bf16.mxu0 %v477
        %594 = vmatmul.mubr.bf16.gmra.mxu0 %v271
        %v595 = vpop.f32.mrf.mxu0
        %v596 = vadd.f32 0.0, %v595
        %v597 = vpop.f32.mrf.mxu0
        %v598 = vpop.f32.mrf.mxu0
        %v599 = vadd.f32 0.0, %v598
        %v600 = vpop.f32.mrf.mxu0
        %601 = vmatprep.mubr.bf16.mxu0 %v480
        %602 = vmatmul.mubr.bf16.gmra.mxu0 %v273
        %v603 = vpop.f32.mrf.mxu0
        %v604 = vadd.f32 0.0, %v603
        %v605 = vpop.f32.mrf.mxu0
        %v606 = vpop.f32.mrf.mxu0
        %v607 = vadd.f32 0.0, %v606
        %v608 = vpop.f32.mrf.mxu0
        %609 = vmatprep.mubr.bf16.mxu0 %v483
        %610 = vmatmul.mubr.bf16.gmra.mxu0 %v275
        %v611 = vpop.f32.mrf.mxu0
        %v612 = vadd.f32 0.0, %v611
        %v613 = vpop.f32.mrf.mxu0
        %v614 = vpop.f32.mrf.mxu0
        %v615 = vadd.f32 0.0, %v614
        %v616 = vpop.f32.mrf.mxu0
        %617 = vmatprep.mubr.bf16.mxu0 %v486
        %618 = vmatmul.mubr.bf16.gmra.mxu0 %v277
        %v619 = vpop.f32.mrf.mxu0
        %v620 = vadd.f32 0.0, %v619
        %v621 = vpop.f32.mrf.mxu0
        %v622 = vpop.f32.mrf.mxu0
        %v623 = vadd.f32 0.0, %v622
        %v624 = vpop.f32.mrf.mxu0
        %625 = vdwg.mxu0
        %v626 = vld [vmem:[%s2] sm:$0xff]
        %v627 = vld [vmem:[%s2 + $0x8] sm:$0xff]
        %v628 = vld [vmem:[%s2 + $0x10] sm:$0xff]
        %v629 = vld [vmem:[%s2 + $0x18] sm:$0xff]
        %v630 = vld [vmem:[%s2 + $0x20] sm:$0xff]
        %v631 = vld [vmem:[%s2 + $0x28] sm:$0xff]
        %v632 = vld [vmem:[%s2 + $0x30] sm:$0xff]
        %v633 = vld [vmem:[%s2 + $0x38] sm:$0xff]
        %v634 = vld [vmem:[%s2 + $0x40] sm:$0xff]
        %v635 = vld [vmem:[%s2 + $0x48] sm:$0xff]
        %v636 = vld [vmem:[%s2 + $0x50] sm:$0xff]
        %v637 = vld [vmem:[%s2 + $0x58] sm:$0xff]
        %v638 = vld [vmem:[%s2 + $0x60] sm:$0xff]
        %v639 = vld [vmem:[%s2 + $0x68] sm:$0xff]
        %v640 = vld [vmem:[%s2 + $0x70] sm:$0xff]
        %v641 = vld [vmem:[%s2 + $0x78] sm:$0xff]
        %v642 = vld [vmem:[%s2 + $0x80] sm:$0xff]
        %v643 = vld [vmem:[%s2 + $0x88] sm:$0xff]
        %v644 = vld [vmem:[%s2 + $0x90] sm:$0xff]
        %v645 = vld [vmem:[%s2 + $0x98] sm:$0xff]
        %v646 = vld [vmem:[%s2 + $0xa0] sm:$0xff]
        %v647 = vld [vmem:[%s2 + $0xa8] sm:$0xff]
        %v648 = vld [vmem:[%s2 + $0xb0] sm:$0xff]
        %v649 = vld [vmem:[%s2 + $0xb8] sm:$0xff]
        %v650 = vadd.f32 %v523, %v626
        %v651 = vadd.f32 %v525, %v627
        %v652 = vadd.f32 %v596, %v628
        %v653 = vadd.f32 %v527, %v629
        %v654 = vadd.f32 %v529, %v630
        %v655 = vadd.f32 %v599, %v631
        %v656 = vadd.f32 %v533, %v632
        %v657 = vadd.f32 %v535, %v633
        %v658 = vadd.f32 %v604, %v634
        %v659 = vadd.f32 %v537, %v635
        %v660 = vadd.f32 %v539, %v636
        %v661 = vadd.f32 %v607, %v637
        %v662 = vadd.f32 %v543, %v638
        %v663 = vadd.f32 %v545, %v639
        %v664 = vadd.f32 %v612, %v640
        %v665 = vadd.f32 %v547, %v641
        %v666 = vadd.f32 %v549, %v642
        %v667 = vadd.f32 %v615, %v643
        %v668 = vadd.f32 %v553, %v644
        %v669 = vadd.f32 %v555, %v645
        %v670 = vadd.f32 %v620, %v646
        %v671 = vadd.f32 %v557, %v647
        %v672 = vadd.f32 %v559, %v648
        %v673 = vadd.f32 %v623, %v649
        %674 = vst [vmem:[%s181] sm:$0xff] %v650
        %675 = vst [vmem:[%s181 + $0x8] sm:$0xff] %v651
        %676 = vst [vmem:[%s181 + $0x10] sm:$0xff] %v652
        %677 = vst [vmem:[%s181 + $0x18] sm:$0xff] %v653
        %678 = vst [vmem:[%s181 + $0x20] sm:$0xff] %v654
        %679 = vst [vmem:[%s181 + $0x28] sm:$0xff] %v655
        %680 = vst [vmem:[%s181 + $0x30] sm:$0xff] %v656
        %681 = vst [vmem:[%s181 + $0x38] sm:$0xff] %v657
        %682 = vst [vmem:[%s181 + $0x40] sm:$0xff] %v658
        %683 = vst [vmem:[%s181 + $0x48] sm:$0xff] %v659
        %684 = vst [vmem:[%s181 + $0x50] sm:$0xff] %v660
        %685 = vst [vmem:[%s181 + $0x58] sm:$0xff] %v661
        %686 = vst [vmem:[%s181 + $0x60] sm:$0xff] %v662
        %687 = vst [vmem:[%s181 + $0x68] sm:$0xff] %v663
        %688 = vst [vmem:[%s181 + $0x70] sm:$0xff] %v664
        %689 = vst [vmem:[%s181 + $0x78] sm:$0xff] %v665
        %690 = vst [vmem:[%s181 + $0x80] sm:$0xff] %v666
        %691 = vst [vmem:[%s181 + $0x88] sm:$0xff] %v667
        %692 = vst [vmem:[%s181 + $0x90] sm:$0xff] %v668
        %693 = vst [vmem:[%s181 + $0x98] sm:$0xff] %v669
        %694 = vst [vmem:[%s181 + $0xa0] sm:$0xff] %v670
        %695 = vst [vmem:[%s181 + $0xa8] sm:$0xff] %v671
        %696 = vst [vmem:[%s181 + $0xb0] sm:$0xff] %v672
        %697 = vst [vmem:[%s181 + $0xb8] sm:$0xff] %v673
        %s698 = sand.u32 %s94, 1
        %s699 = scalar_lea.sflag [#allocation4], %s698
        %s700 = sand.u32 %s94, 1
        %s701 = smul.addr %s700, 192
        %s702 = scalar_lea.vmem [#allocation5], %s701
        // Predicated region
        $region37: #{tpu_custom_call.1} parent=31 // pred_check
          %p703 = pneg %p104
        $region38: #{tpu_custom_call.1} parent=31 // pred_check_branch
          %705 = sbr.rel (%p703) target = $region40
        $region39: #{tpu_custom_call.1} parent=31 // pred_region
          %s706 = smul.u32 8, %s18
          %s708 = ssub.s32 3072, 3072
          %709 = vsyncadd %s699, %s708
          %s710 = smul.addr %s706, 3
          %s711 = smul.addr %s710, 128
          %s712 = scalar_lea.hbm %s3, %s711
          %s713 = sshll.u32 %s702, 4
          %s714 = int_to_ptr.vmem [resolvable:$true] %s713
          %719 = dma.vmem_to_hbm [thread:$0]  %s714, 3072, %s712, %s699, 384, 384, 24
        $region40: #{tpu_custom_call.1} parent=31 // pred_fallthru
          _
      $region32: #{tpu_custom_call.1} parent=5 // pred_fallthru
        _
      %p720 = scmp.le.s32.totalorder 2, %s13
      // Predicated region
      $region41: #{tpu_custom_call.1} parent=5 // pred_check
        %p721 = pneg %p720
      $region42: #{tpu_custom_call.1} parent=5 // pred_check_branch
        %723 = sbr.rel (%p721) target = $region44
      $region43: #{tpu_custom_call.1} parent=5 // pred_region
        %s724 = ssub.s32 %s13, 2
        // Predicated region
        $region45: #{tpu_custom_call.1} parent=43 // pred_check
          %p725 = pneg %p110
        $region46: #{tpu_custom_call.1} parent=43 // pred_check_branch
          %727 = sbr.rel (%p725) target = $region48
        $region47: #{tpu_custom_call.1} parent=43 // pred_region
          %s728 = sand.u32 %s95, 1
          %s729 = scalar_lea.sflag [#allocation4], %s728
          %s730 = sand.u32 %s95, 1
          %s731 = smul.addr %s730, 192
          %s732 = scalar_lea.vmem [#allocation5], %s731
          %733 = dma.done %s729, 3072
        $region48: #{tpu_custom_call.1} parent=43 // pred_fallthru
          _
      $region44: #{tpu_custom_call.1} parent=5 // pred_fallthru
        _
    $region6: #{tpu_custom_call.1} parent=1 // loop_footer
      %s17 = sadd.s32 1, %s13
    $region7: #{tpu_custom_call.1} parent=1 // loop_footer_branch
      %12 = sbr.rel target = $region3
    $region8: #{tpu_custom_call.1} parent=1 // loop_exit
      _
    %734 = vsyncpa [#allocation3], 1
    %s735 = scalar_lea.sflag [#allocation3], 1
    %736 = vsyncpa %s735, 1
    %737 = vsyncpa [#allocation4], 1
    %s738 = scalar_lea.sflag [#allocation4], 1
    %739 = vsyncpa %s738, 1

</llo_original>
